<compile_context>
chip_gen: v7x
topology: tpu7x:2x2x1
jax: 0.10.0
libtpu: 0.0.40
codegen_flags: <defaults>
</compile_context>

<pallas_src>
import math

import jax
import jax.numpy as jnp
from jax.experimental import pallas as pl
from jax.experimental.pallas import tpu as pltpu


def residence_kernel(ctx_ref, emb_ref, w1c_ref, w2_ref, b2_ref,
                     w3_ref, b3_ref, ones_ref, o_ref):
    # ctx_ref : (TB, C)        context tile (f32; cast to MXU dtype at the dot)
    # emb_ref : (KP, P*H)      packed (emb @ W1e + b1), KP = S_pad / P  (f32)
    # w1c_ref : (C, P*H)       W1c tiled P times along lanes (matmul dtype)
    # w2_ref  : (P*H, P*H)     block-diag W2 (matmul dtype); b2_ref (1, P*H) f32
    # w3_ref  : (P*H, P*T)     block-diag W3 (matmul dtype); b3_ref (1, P*T) f32
    # ones_ref: (P*T, P*T)     block-diag ones(T,T) for segmented row sums (f32)
    # o_ref   : (TB*KP, P*T)   lane-packed softmax rows, f32
    tb = ctx_ref.shape[0]
    kp, ph = emb_ref.shape

    # layer 1: context projection + broadcast add of the hoisted embedding half
    ctx_p = jnp.dot(ctx_ref[...].astype(w1c_ref.dtype), w1c_ref[...],
                    preferred_element_type=jnp.float32)              # (TB, P*H)
    x = (ctx_p[:, None, :] + emb_ref[...][None, :, :]).reshape(tb * kp, ph)
    h1 = jnp.tanh(x)                                                 # (TB*KP, P*H)

    # layer 2 (block-diagonal W2 keeps the P packed logical rows independent)
    h2 = jnp.tanh(jnp.dot(h1.astype(w2_ref.dtype), w2_ref[...],
                          preferred_element_type=jnp.float32) + b2_ref[...])

    # layer 3 + fused lane-packed softmax over each T-wide lane block
    logits = jnp.dot(h2.astype(w3_ref.dtype), w3_ref[...],
                     preferred_element_type=jnp.float32) + b3_ref[...]
    # one shift constant per packed row: softmax is shift-invariant per logical
    # row, and the max over the pack upper-bounds every block max (no overflow)
    m = jnp.max(logits, axis=-1, keepdims=True)
    p = jnp.exp(logits - m)
    # per-block sums broadcast back to all T lanes of their block via the
    # block-diagonal ones matrix (MXU; avoids a lane-relayout reshape)
    denom = jnp.dot(p, ones_ref[...], preferred_element_type=jnp.float32)
    o_ref[...] = (p * pl.reciprocal(denom, approx=True)).astype(o_ref.dtype)


def residence_net(state_embeddings, context, w1e, w1c, b1, w2, b2, w3, b3,
                  *, batch_size=None, row_target=8192,
                  matmul_dtype=jnp.bfloat16):
    """Pallas forward for ResidenceNet (eval mode).

    state_embeddings: (num_state, embedding_size)
    context:          (batch, context_size) or None (use_beat=False path)
    Weights are pre-transposed: w1e (E, H), w1c (C, H), w2 (H, H), w3 (H, T).
    Returns the softmaxed residence matrix (batch, num_state, T)."""
    S, E = state_embeddings.shape
    H = w2.shape[0]
    T = w3.shape[1]

    if context is None:
        # use_beat=False: zero context column + zero weights -> no contribution
        if batch_size is None:
            raise ValueError("batch_size is required when context is None")
        context = jnp.zeros((batch_size, 1), jnp.float32)
        w1c = jnp.zeros((1, H), jnp.float32)
    B, C = context.shape

    f32 = jnp.float32
    emb = state_embeddings.astype(f32)
    ctx = context.astype(f32)
    w1e = w1e.astype(f32)
    w1c = w1c.astype(f32)
    b1 = b1.astype(f32)
    w2 = w2.astype(f32)
    b2 = b2.astype(f32)
    w3 = w3.astype(f32)
    b3 = b3.astype(f32)

    # lane-packing factor: P logical rows per 128-lane physical row
    P = 128 // H if (H <= 128 and 128 % H == 0) else 1

    # pad the state axis to a multiple of lcm(8, P) so packs never straddle
    # sublane tiles or batch boundaries
    smul = 8 * P // math.gcd(8, P)
    s_pad = pl.cdiv(S, smul) * smul
    if s_pad != S:
        emb = jnp.pad(emb, ((0, s_pad - S), (0, 0)))

    # hoisted, grid-invariant layer-1 embedding half, packed P rows per row
    emb_packed = (emb @ w1e + b1).reshape(s_pad // P, P * H)           # f32

    # block-diagonal / lane-tiled weights for the packed hidden path
    eye = jnp.eye(P, dtype=f32)
    w1c_t = jnp.tile(w1c, (1, P)).astype(matmul_dtype)                 # (C, P*H)
    w2_bd = jnp.kron(eye, w2).astype(matmul_dtype)                     # (P*H, P*H)
    w3_bd = jnp.kron(eye, w3).astype(matmul_dtype)                     # (P*H, P*T)
    b2_t = jnp.tile(b2, (1, P))                                        # (1, P*H) f32
    b3_t = jnp.tile(b3, (1, P))                                        # (1, P*T) f32
    ones_bd = jnp.kron(eye, jnp.ones((T, T), f32))                     # (P*T, P*T)

    # batch tiling: ~row_target logical (b, s) rows per grid step; force >= 2
    # steps when B is large enough so v7x's second TensorCore gets work.
    n_steps = max(1, pl.cdiv(B * s_pad, row_target))
    if B >= 16:
        n_steps = max(n_steps, 2)
    tb = pl.cdiv(B, n_steps)
    if tb >= B:
        tb, b_pad = B, B                    # single step: full-array block
    else:
        tb = pl.cdiv(tb, 8) * 8             # sublane-aligned batch tile
        b_pad = pl.cdiv(B, tb) * tb
        if tb >= b_pad:
            tb = b_pad
    if b_pad != B:
        ctx = jnp.pad(ctx, ((0, b_pad - B), (0, 0)))

    grid = (b_pad // tb,)
    kp = s_pad // P                         # packed state rows per batch elem
    ph, pt = P * H, P * T

    out = pl.pallas_call(
        residence_kernel,
        out_shape=jax.ShapeDtypeStruct((b_pad * kp, pt), f32),
        grid_spec=pltpu.PrefetchScalarGridSpec(
            num_scalar_prefetch=0,
            grid=grid,
            in_specs=[
                pl.BlockSpec((tb, C), lambda i: (i, 0)),     # context tile
                pl.BlockSpec((kp, ph), lambda i: (0, 0)),    # packed emb proj
                pl.BlockSpec((C, ph), lambda i: (0, 0)),     # W1c lane-tiled
                pl.BlockSpec((ph, ph), lambda i: (0, 0)),    # block-diag W2
                pl.BlockSpec((1, ph), lambda i: (0, 0)),     # b2 lane-tiled
                pl.BlockSpec((ph, pt), lambda i: (0, 0)),    # block-diag W3
                pl.BlockSpec((1, pt), lambda i: (0, 0)),     # b3 lane-tiled
                pl.BlockSpec((pt, pt), lambda i: (0, 0)),    # block-diag ones
            ],
            out_specs=pl.BlockSpec((tb * kp, pt), lambda i: (i, 0)),
        ),
        compiler_params=pltpu.CompilerParams(
            dimension_semantics=("parallel",),
            vmem_limit_bytes=48 * 1024 * 1024),
    )(ctx, emb_packed, w1c_t, w2_bd, b2_t, w3_bd, b3_t, ones_bd)

    # unpack the lane-dense output: packed row (b, k) lane-block j = state k*P+j
    out = out.reshape(b_pad, kp, P, T).reshape(b_pad, s_pad, T)
    return out[:B, :S]


def init_params(key, embedding_size, context_size, hidden_size,
                max_residential_time):
    """nn.Linear-style uniform init; weights returned pre-transposed."""
    kE, kC, kb1, kw2, kb2, kw3, kb3 = jax.random.split(key, 7)
    cat_in = embedding_size + context_size
    bnd1 = 1.0 / float(cat_in) ** 0.5
    bnd2 = 1.0 / float(hidden_size) ** 0.5
    w1e = jax.random.uniform(kE, (embedding_size, hidden_size), jnp.float32, -bnd1, bnd1)
    w1c = jax.random.uniform(kC, (context_size, hidden_size), jnp.float32, -bnd1, bnd1)
    b1 = jax.random.uniform(kb1, (1, hidden_size), jnp.float32, -bnd1, bnd1)
    w2 = jax.random.uniform(kw2, (hidden_size, hidden_size), jnp.float32, -bnd2, bnd2)
    b2 = jax.random.uniform(kb2, (1, hidden_size), jnp.float32, -bnd2, bnd2)
    w3 = jax.random.uniform(kw3, (hidden_size, max_residential_time), jnp.float32, -bnd2, bnd2)
    b3 = jax.random.uniform(kb3, (1, max_residential_time), jnp.float32, -bnd2, bnd2)
    return w1e, w1c, b1, w2, b2, w3, b3


def reference(state_embeddings, context, w1e, w1c, b1, w2, b2, w3, b3):
    """Pure-JAX mirror of ResidenceNet.residence_matrix (eval mode, f32)."""
    B = context.shape[0]
    S, E = state_embeddings.shape
    C = context.shape[1]
    e = jnp.broadcast_to(state_embeddings[None], (B, S, E))
    c = jnp.broadcast_to(context[:, None, :], (B, S, C))
    x = jnp.concatenate([e, c], axis=-1)
    w1 = jnp.concatenate([w1e, w1c], axis=0)
    h1 = jnp.tanh(x @ w1 + b1[0])
    h2 = jnp.tanh(h1 @ w2 + b2[0])
    logits = h2 @ w3 + b3[0]
    return jax.nn.softmax(logits, axis=-1)


if __name__ == "__main__":
    key = jax.random.PRNGKey(0)
    k_emb, k_ctx, k_param, k_emb2, k_ctx2 = jax.random.split(key, 5)

    # config: use_beat=True, num_state=16, embedding_size=32,
    # beat_encoding_size=16, residence_hidden_size=32, max_residential_time=32
    batch, num_state = 4, 16
    E, C, H, T = 32, 16, 32, 32

    state_embeddings = jax.random.normal(k_emb, (num_state, E), jnp.float32)
    context = jax.random.normal(k_ctx, (batch, C), jnp.float32)
    params = init_params(k_param, E, C, H, T)

    ref = reference(state_embeddings, context, *params)

    # default path: bf16 MXU operands, f32 activations, approx reciprocal
    out = residence_net(state_embeddings, context, *params)
    out = jax.block_until_ready(out)
    assert out.shape == (batch, num_state, T), out.shape
    assert jnp.allclose(out, ref, atol=1e-2, rtol=0.05), \
        float(jnp.max(jnp.abs(out - ref)))
    assert jnp.allclose(out.sum(-1), 1.0, atol=5e-3)   # softmax rows sum to 1

    # f32-matmul path: tight structural check of the packed/fused kernel
    out32 = residence_net(state_embeddings, context, *params,
                          matmul_dtype=jnp.float32)
    out32 = jax.block_until_ready(out32)
    assert jnp.allclose(out32, ref, atol=2e-3, rtol=0.0), \
        float(jnp.max(jnp.abs(out32 - ref)))

    # larger batch + odd num_state exercises the multi-step grid and padding
    batch2, num_state2 = 20, 12
    emb2 = jax.random.normal(k_emb2, (num_state2, E), jnp.float32)
    ctx2 = jax.random.normal(k_ctx2, (batch2, C), jnp.float32)
    ref2 = reference(emb2, ctx2, *params)
    out2 = jax.block_until_ready(residence_net(emb2, ctx2, *params))
    assert out2.shape == (batch2, num_state2, T), out2.shape
    assert jnp.allclose(out2, ref2, atol=1e-2, rtol=0.05), \
        float(jnp.max(jnp.abs(out2 - ref2)))

    print("KERNEL_OK")
</pallas_src>

<mosaic_0001>
module attributes {stable_mosaic.version = 11 : i64} {
  func.func @residence_kernel(%arg0: i32, %arg1: memref<4x16xf32, #tpu.memory_space<vmem>>, %arg2: memref<4x128xf32, #tpu.memory_space<vmem>>, %arg3: memref<16x128xbf16, #tpu.memory_space<vmem>>, %arg4: memref<128x128xbf16, #tpu.memory_space<vmem>>, %arg5: memref<1x128xf32, #tpu.memory_space<vmem>>, %arg6: memref<128x128xbf16, #tpu.memory_space<vmem>>, %arg7: memref<1x128xf32, #tpu.memory_space<vmem>>, %arg8: memref<128x128xf32, #tpu.memory_space<vmem>>, %arg9: memref<16x128xf32, #tpu.memory_space<vmem>>) attributes {dimension_semantics = [#tpu.dimension_semantics<parallel>], iteration_bounds = array<i64: 1>, scalar_prefetch = 0 : i64, scratch_operands = 0 : i64, tpu.core_type = #tpu.core_type<tc>, window_params = [{transform_indices = @transform_0, window_bounds = array<i64: 4, 16>}, {pipeline_mode = #tpu.pipeline_mode<synchronous>, transform_indices = @transform_1, window_bounds = array<i64: 4, 128>}, {pipeline_mode = #tpu.pipeline_mode<synchronous>, transform_indices = @transform_2, window_bounds = array<i64: 16, 128>}, {pipeline_mode = #tpu.pipeline_mode<synchronous>, transform_indices = @transform_3, window_bounds = array<i64: 128, 128>}, {pipeline_mode = #tpu.pipeline_mode<synchronous>, transform_indices = @transform_4, window_bounds = array<i64: 1, 128>}, {pipeline_mode = #tpu.pipeline_mode<synchronous>, transform_indices = @transform_5, window_bounds = array<i64: 128, 128>}, {pipeline_mode = #tpu.pipeline_mode<synchronous>, transform_indices = @transform_6, window_bounds = array<i64: 1, 128>}, {pipeline_mode = #tpu.pipeline_mode<synchronous>, transform_indices = @transform_7, window_bounds = array<i64: 128, 128>}, {transform_indices = @transform_8, window_bounds = array<i64: 16, 128>}]} {
    %c0 = arith.constant 0 : index
    %c0_0 = arith.constant 0 : index
    %0 = vector.load %arg1[%c0, %c0_0] : memref<4x16xf32, #tpu.memory_space<vmem>>, vector<4x16xf32>
    %1 = arith.truncf %0 : vector<4x16xf32> to vector<4x16xbf16>
    %c0_1 = arith.constant 0 : index
    %c0_2 = arith.constant 0 : index
    %2 = vector.load %arg3[%c0_1, %c0_2] : memref<16x128xbf16, #tpu.memory_space<vmem>>, vector<16x128xbf16>
    %cst = arith.constant dense<0.000000e+00> : vector<4x128xf32>
    %3 = tpu.matmul %1, %2, %cst {dimension_numbers = #tpu.dot_dimension_numbers<[1], [0], [0], [1], [0, 0, 1, 1], [], []>} : vector<4x16xbf16>, vector<16x128xbf16>, vector<4x128xf32> -> vector<4x128xf32>
    %4 = vector.shape_cast %3 : vector<4x128xf32> to vector<4x1x128xf32>
    %c0_3 = arith.constant 0 : index
    %c0_4 = arith.constant 0 : index
    %5 = vector.load %arg2[%c0_3, %c0_4] : memref<4x128xf32, #tpu.memory_space<vmem>>, vector<4x128xf32>
    %6 = vector.shape_cast %5 : vector<4x128xf32> to vector<1x4x128xf32>
    %7 = vector.broadcast %4 : vector<4x1x128xf32> to vector<4x4x128xf32>
    %8 = vector.broadcast %6 : vector<1x4x128xf32> to vector<4x4x128xf32>
    %9 = arith.addf %7, %8 : vector<4x4x128xf32>
    %10 = vector.shape_cast %9 : vector<4x4x128xf32> to vector<16x128xf32>
    %11 = math.tanh %10 : vector<16x128xf32>
    %12 = arith.truncf %11 : vector<16x128xf32> to vector<16x128xbf16>
    %c0_5 = arith.constant 0 : index
    %c0_6 = arith.constant 0 : index
    %13 = vector.load %arg4[%c0_5, %c0_6] : memref<128x128xbf16, #tpu.memory_space<vmem>>, vector<128x128xbf16>
    %cst_7 = arith.constant dense<0.000000e+00> : vector<16x128xf32>
    %14 = tpu.matmul %12, %13, %cst_7 {dimension_numbers = #tpu.dot_dimension_numbers<[1], [0], [0], [1], [0, 0, 1, 1], [], []>} : vector<16x128xbf16>, vector<128x128xbf16>, vector<16x128xf32> -> vector<16x128xf32>
    %c0_8 = arith.constant 0 : index
    %c0_9 = arith.constant 0 : index
    %15 = vector.load %arg5[%c0_8, %c0_9] : memref<1x128xf32, #tpu.memory_space<vmem>>, vector<1x128xf32>
    %16 = vector.broadcast %15 : vector<1x128xf32> to vector<16x128xf32>
    %17 = arith.addf %14, %16 : vector<16x128xf32>
    %18 = math.tanh %17 : vector<16x128xf32>
    %19 = arith.truncf %18 : vector<16x128xf32> to vector<16x128xbf16>
    %c0_10 = arith.constant 0 : index
    %c0_11 = arith.constant 0 : index
    %20 = vector.load %arg6[%c0_10, %c0_11] : memref<128x128xbf16, #tpu.memory_space<vmem>>, vector<128x128xbf16>
    %cst_12 = arith.constant dense<0.000000e+00> : vector<16x128xf32>
    %21 = tpu.matmul %19, %20, %cst_12 {dimension_numbers = #tpu.dot_dimension_numbers<[1], [0], [0], [1], [0, 0, 1, 1], [], []>} : vector<16x128xbf16>, vector<128x128xbf16>, vector<16x128xf32> -> vector<16x128xf32>
    %c0_13 = arith.constant 0 : index
    %c0_14 = arith.constant 0 : index
    %22 = vector.load %arg7[%c0_13, %c0_14] : memref<1x128xf32, #tpu.memory_space<vmem>>, vector<1x128xf32>
    %23 = vector.broadcast %22 : vector<1x128xf32> to vector<16x128xf32>
    %24 = arith.addf %21, %23 : vector<16x128xf32>
    %cst_15 = arith.constant dense<0xFF800000> : vector<16xf32>
    %25 = vector.multi_reduction <maximumf>, %24, %cst_15 [1] : vector<16x128xf32> to vector<16xf32>
    %26 = vector.shape_cast %25 : vector<16xf32> to vector<16x1xf32>
    %27 = vector.broadcast %26 : vector<16x1xf32> to vector<16x128xf32>
    %28 = arith.subf %24, %27 : vector<16x128xf32>
    %29 = math.exp %28 : vector<16x128xf32>
    %c0_16 = arith.constant 0 : index
    %c0_17 = arith.constant 0 : index
    %30 = vector.load %arg8[%c0_16, %c0_17] : memref<128x128xf32, #tpu.memory_space<vmem>>, vector<128x128xf32>
    %cst_18 = arith.constant dense<0.000000e+00> : vector<16x128xf32>
    %31 = tpu.matmul %29, %30, %cst_18 {dimension_numbers = #tpu.dot_dimension_numbers<[1], [0], [0], [1], [0, 0, 1, 1], [], []>} : vector<16x128xf32>, vector<128x128xf32>, vector<16x128xf32> -> vector<16x128xf32>
    %32 = tpu.reciprocal %31 {approx = true} : vector<16x128xf32> -> vector<16x128xf32>
    %33 = arith.mulf %29, %32 : vector<16x128xf32>
    %c0_19 = arith.constant 0 : index
    %c0_20 = arith.constant 0 : index
    %34 = vector.load %arg9[%c0_19, %c0_20] : memref<16x128xf32, #tpu.memory_space<vmem>>, vector<16x128xf32>
    tpu.vector_store %arg9[%c0_19, %c0_20], %33 {strides = array<i32>} : memref<16x128xf32, #tpu.memory_space<vmem>>, vector<16x128xf32>,
    return
  }
  func.func @transform_0(%arg0: i32) -> (i32, i32) {
    %c0_i32 = arith.constant 0 : i32
    %c0_i32_0 = arith.constant 0 : i32
    return %arg0, %c0_i32 : i32, i32
  }
  func.func @transform_1(%arg0: i32) -> (i32, i32) {
    %c0_i32 = arith.constant 0 : i32
    %c0_i32_0 = arith.constant 0 : i32
    %c0_i32_1 = arith.constant 0 : i32
    return %c0_i32, %c0_i32_0 : i32, i32
  }
  func.func @transform_2(%arg0: i32) -> (i32, i32) {
    %c0_i32 = arith.constant 0 : i32
    %c0_i32_0 = arith.constant 0 : i32
    %c0_i32_1 = arith.constant 0 : i32
    return %c0_i32, %c0_i32_0 : i32, i32
  }
  func.func @transform_3(%arg0: i32) -> (i32, i32) {
    %c0_i32 = arith.constant 0 : i32
    %c0_i32_0 = arith.constant 0 : i32
    %c0_i32_1 = arith.constant 0 : i32
    return %c0_i32, %c0_i32_0 : i32, i32
  }
  func.func @transform_4(%arg0: i32) -> (i32, i32) {
    %c0_i32 = arith.constant 0 : i32
    %c0_i32_0 = arith.constant 0 : i32
    %c0_i32_1 = arith.constant 0 : i32
    return %c0_i32, %c0_i32_0 : i32, i32
  }
  func.func @transform_5(%arg0: i32) -> (i32, i32) {
    %c0_i32 = arith.constant 0 : i32
    %c0_i32_0 = arith.constant 0 : i32
    %c0_i32_1 = arith.constant 0 : i32
    return %c0_i32, %c0_i32_0 : i32, i32
  }
  func.func @transform_6(%arg0: i32) -> (i32, i32) {
    %c0_i32 = arith.constant 0 : i32
    %c0_i32_0 = arith.constant 0 : i32
    %c0_i32_1 = arith.constant 0 : i32
    return %c0_i32, %c0_i32_0 : i32, i32
  }
  func.func @transform_7(%arg0: i32) -> (i32, i32) {
    %c0_i32 = arith.constant 0 : i32
    %c0_i32_0 = arith.constant 0 : i32
    %c0_i32_1 = arith.constant 0 : i32
    return %c0_i32, %c0_i32_0 : i32, i32
  }
  func.func @transform_8(%arg0: i32) -> (i32, i32) {
    %c0_i32 = arith.constant 0 : i32
    %c0_i32_0 = arith.constant 0 : i32
    return %arg0, %c0_i32 : i32, i32
  }
}

</mosaic_0001>

<llo_original>
// kernel: tpu_custom_call.1
$region0: #{tpu_custom_call.1}
  #allocation0 [shape = 'u32[]', space=smem, size = 0x4, offset = 0x4, fixed_abs, tag = 'smem constant byte address 0x4 - core index']
  #allocation1 [shape = 'u32[144,128]{1,0:T(1,128)}', space=vmem, size = 0x12000, scoped, tag = 'internal scratch']
  %s0 = inlined_call_operand.hbm [shape: f32[4,16], index: 0, kind: input, shape index: {}]
  %s1 = inlined_call_operand.hbm [shape: f32[4,128], index: 1, kind: input, shape index: {}]
  %s2 = inlined_call_operand.hbm [shape: bf16[16,128], index: 2, kind: input, shape index: {}]
  %s3 = inlined_call_operand.hbm [shape: bf16[128,128], index: 3, kind: input, shape index: {}]
  %s4 = inlined_call_operand.vmem [shape: f32[1,128], index: 4, kind: input, shape index: {}]
  %s5 = inlined_call_operand.hbm [shape: bf16[128,128], index: 5, kind: input, shape index: {}]
  %s6 = inlined_call_operand.vmem [shape: f32[1,128], index: 6, kind: input, shape index: {}]
  %s7 = inlined_call_operand.hbm [shape: f32[128,128], index: 7, kind: input, shape index: {}]
  %s8 = inlined_call_operand.hbm [shape: f32[16,128], index: 8, kind: output, shape index: {}]
  %s9 = sld [smem:[#allocation0]]
  $region66: #{tpu_custom_call.1} parent=0
    _
  %s11 = ssub.s32 1, %s9
  %s12 = scalar_select 0, %s11, %s9
  $region1: #{tpu_custom_call.1} parent=0
    #allocation2 [shape = 'u8[2048]{0}', space=vmem, size = 0x800, scoped, tag = 'input window, operand 0, single buffered']
    #allocation3 [shape = 's32[1]{0}', space=sflag, size = 0x4, scoped, tag = 'scoped memory for tpu_custom_call.1']
    #allocation4 [shape = 's32[1]{0}', space=sflag, size = 0x4, scoped, tag = 'scoped memory for tpu_custom_call.1']
    #allocation5 [shape = 'u8[2048]{0}', space=vmem, size = 0x800, scoped, tag = 'input window, operand 1, single buffered']
    #allocation6 [shape = 's32[1]{0}', space=sflag, size = 0x4, scoped, tag = 'scoped memory for tpu_custom_call.1']
    #allocation7 [shape = 'u8[4096]{0}', space=vmem, size = 0x1000, scoped, tag = 'input window, operand 2, single buffered']
    #allocation8 [shape = 'u8[32768]{0}', space=vmem, size = 0x8000, scoped, tag = 'input window, operand 3, single buffered']
    #allocation9 [shape = 's32[1]{0}', space=sflag, size = 0x4, scoped, tag = 'scoped memory for tpu_custom_call.1']
    #allocation10 [shape = 'u8[32768]{0}', space=vmem, size = 0x8000, scoped, tag = 'input window, operand 5, single buffered']
    #allocation11 [shape = 'u8[65536]{0}', space=vmem, size = 0x10000, scoped, tag = 'input window, operand 7, single buffered']
    #allocation12 [shape = 's32[1]{0}', space=sflag, size = 0x4, scoped, tag = 'scoped memory for tpu_custom_call.1']
    #allocation13 [shape = 'u8[8192]{0}', space=vmem, size = 0x2000, scoped, tag = 'output window, operand 0, single buffered']
    %13 = vsyncpa [#allocation3], 0
    %14 = vsyncpa [#allocation6], 0
    %15 = vsyncpa [#allocation9], 0
    %16 = vsyncpa [#allocation12], 0
    %17 = vsyncpa [#allocation4], 0
    // Predicated region
    $region2: #{tpu_custom_call.1} parent=1 // pred_check
      _
    $region3: #{tpu_custom_call.1} parent=1 // pred_check_branch
      %19 = sbr.rel (0) target = $region5
    $region4: #{tpu_custom_call.1} parent=1 // pred_region
      %s21 = ssub.s32 64, 64
      %22 = vsyncadd [#allocation3], %s21
      %s24 = sshll.u32 [#allocation2], 4
      %s25 = int_to_ptr.vmem [resolvable:$true] %s24
      %27 = dma.hbm_to_vmem [thread:$0]  %s0, 64, %s25, [#allocation3]
    $region5: #{tpu_custom_call.1} parent=1 // pred_fallthru
      _
    // Predicated region
    $region6: #{tpu_custom_call.1} parent=1 // pred_check
      _
    $region7: #{tpu_custom_call.1} parent=1 // pred_check_branch
      %29 = sbr.rel (0) target = $region9
    $region8: #{tpu_custom_call.1} parent=1 // pred_region
      %s31 = ssub.s32 64, 64
      %32 = vsyncadd [#allocation6], %s31
      %s34 = sshll.u32 [#allocation5], 4
      %s35 = int_to_ptr.vmem [resolvable:$true] %s34
      %37 = dma.hbm_to_vmem [thread:$0]  %s1, 64, %s35, [#allocation6]
    $region9: #{tpu_custom_call.1} parent=1 // pred_fallthru
      _
    // Predicated region
    $region10: #{tpu_custom_call.1} parent=1 // pred_check
      _
    $region11: #{tpu_custom_call.1} parent=1 // pred_check_branch
      %39 = sbr.rel (0) target = $region13
    $region12: #{tpu_custom_call.1} parent=1 // pred_region
      %s41 = ssub.s32 128, 128
      %42 = vsyncadd [#allocation6], %s41
      %s43 = sshll.u32 [#allocation7], 4
      %s44 = int_to_ptr.vmem [resolvable:$true] %s43
      %49 = dma.hbm_to_vmem [thread:$0]  %s2, 128, %s44, [#allocation6], 64, 64, 4
    $region13: #{tpu_custom_call.1} parent=1 // pred_fallthru
      _
    // Predicated region
    $region14: #{tpu_custom_call.1} parent=1 // pred_check
      _
    $region15: #{tpu_custom_call.1} parent=1 // pred_check_branch
      %51 = sbr.rel (0) target = $region17
    $region16: #{tpu_custom_call.1} parent=1 // pred_region
      %s53 = ssub.s32 1024, 1024
      %54 = vsyncadd [#allocation9], %s53
      %s55 = sshll.u32 [#allocation8], 4
      %s56 = int_to_ptr.vmem [resolvable:$true] %s55
      %61 = dma.hbm_to_vmem [thread:$0]  %s3, 1024, %s56, [#allocation9], 64, 64, 4
    $region17: #{tpu_custom_call.1} parent=1 // pred_fallthru
      _
    // Predicated region
    $region18: #{tpu_custom_call.1} parent=1 // pred_check
      _
    $region19: #{tpu_custom_call.1} parent=1 // pred_check_branch
      %63 = sbr.rel (0) target = $region21
    $region20: #{tpu_custom_call.1} parent=1 // pred_region
      _
    $region21: #{tpu_custom_call.1} parent=1 // pred_fallthru
      _
    // Predicated region
    $region22: #{tpu_custom_call.1} parent=1 // pred_check
      _
    $region23: #{tpu_custom_call.1} parent=1 // pred_check_branch
      %65 = sbr.rel (0) target = $region25
    $region24: #{tpu_custom_call.1} parent=1 // pred_region
      %s67 = ssub.s32 1024, 1024
      %68 = vsyncadd [#allocation9], %s67
      %s69 = sshll.u32 [#allocation10], 4
      %s70 = int_to_ptr.vmem [resolvable:$true] %s69
      %75 = dma.hbm_to_vmem [thread:$0]  %s5, 1024, %s70, [#allocation9], 64, 64, 4
    $region25: #{tpu_custom_call.1} parent=1 // pred_fallthru
      _
    // Predicated region
    $region26: #{tpu_custom_call.1} parent=1 // pred_check
      _
    $region27: #{tpu_custom_call.1} parent=1 // pred_check_branch
      %77 = sbr.rel (0) target = $region29
    $region28: #{tpu_custom_call.1} parent=1 // pred_region
      _
    $region29: #{tpu_custom_call.1} parent=1 // pred_fallthru
      _
    // Predicated region
    $region30: #{tpu_custom_call.1} parent=1 // pred_check
      _
    $region31: #{tpu_custom_call.1} parent=1 // pred_check_branch
      %79 = sbr.rel (0) target = $region33
    $region32: #{tpu_custom_call.1} parent=1 // pred_region
      %s81 = ssub.s32 2048, 2048
      %82 = vsyncadd [#allocation12], %s81
      %s83 = sshll.u32 [#allocation11], 4
      %s84 = int_to_ptr.vmem [resolvable:$true] %s83
      %89 = dma.hbm_to_vmem [thread:$0]  %s7, 2048, %s84, [#allocation12], 128, 128, 8
    $region33: #{tpu_custom_call.1} parent=1 // pred_fallthru
      _
    // Predicated region
    $region34: #{tpu_custom_call.1} parent=1 // pred_check
      _
    $region35: #{tpu_custom_call.1} parent=1 // pred_check_branch
      %91 = sbr.rel (0) target = $region37
    $region36: #{tpu_custom_call.1} parent=1 // pred_region
      %92 = dma.done [#allocation3], 64
    $region37: #{tpu_custom_call.1} parent=1 // pred_fallthru
      _
    // Predicated region
    $region38: #{tpu_custom_call.1} parent=1 // pred_check
      _
    $region39: #{tpu_custom_call.1} parent=1 // pred_check_branch
      %94 = sbr.rel (0) target = $region41
    $region40: #{tpu_custom_call.1} parent=1 // pred_region
      %95 = dma.done [#allocation6], 64
    $region41: #{tpu_custom_call.1} parent=1 // pred_fallthru
      _
    // Predicated region
    $region42: #{tpu_custom_call.1} parent=1 // pred_check
      _
    $region43: #{tpu_custom_call.1} parent=1 // pred_check_branch
      %97 = sbr.rel (0) target = $region45
    $region44: #{tpu_custom_call.1} parent=1 // pred_region
      %98 = dma.done [#allocation6], 128
    $region45: #{tpu_custom_call.1} parent=1 // pred_fallthru
      _
    // Predicated region
    $region46: #{tpu_custom_call.1} parent=1 // pred_check
      _
    $region47: #{tpu_custom_call.1} parent=1 // pred_check_branch
      %100 = sbr.rel (0) target = $region49
    $region48: #{tpu_custom_call.1} parent=1 // pred_region
      %101 = dma.done [#allocation9], 1024
    $region49: #{tpu_custom_call.1} parent=1 // pred_fallthru
      _
    // Predicated region
    $region50: #{tpu_custom_call.1} parent=1 // pred_check
      _
    $region51: #{tpu_custom_call.1} parent=1 // pred_check_branch
      %103 = sbr.rel (0) target = $region53
    $region52: #{tpu_custom_call.1} parent=1 // pred_region
      %104 = dma.done [#allocation9], 1024
    $region53: #{tpu_custom_call.1} parent=1 // pred_fallthru
      _
    // Predicated region
    $region54: #{tpu_custom_call.1} parent=1 // pred_check
      _
    $region55: #{tpu_custom_call.1} parent=1 // pred_check_branch
      %106 = sbr.rel (0) target = $region57
    $region56: #{tpu_custom_call.1} parent=1 // pred_region
      %107 = dma.done [#allocation12], 2048
    $region57: #{tpu_custom_call.1} parent=1 // pred_fallthru
      _
    %v109 = vld [vmem:[#allocation2] sm:$0xf]
    %v110 = vpack.c.bf16 %v109, %v109
    %v111 = vld [vmem:[#allocation7] sm:$0xf]
    %v112 = vld [vmem:[#allocation7 + $0x4] sm:$0xf]
    %v115 = vunpack.c.l.b16 %v111
    %v116 = vunpack.c.l.b16 %v112
    %v117 = vpack.c.b16 %v116, %v115
    %vm119 = vcmask 130048
    %v121 = vsel %vm119, %v110, 0
    %123 = vmatprep.subr.bf16.mxu0 0
    %124 = vmatpush1.bf16.msra.mxu0 %v117
    %125 = vmatprep.subr.bf16.mxu0 0
    %126 = vmatpush1.bf16.msra.mxu0 0
    %127 = vmatprep.subr.bf16.mxu0 0
    %128 = vmatpush1.bf16.msra.mxu0 0
    %129 = vmatprep.subr.bf16.mxu0 0
    %130 = vmatpush1.bf16.msra.mxu0 0
    %131 = vmatprep.subr.bf16.mxu0 0
    %132 = vmatpush1.bf16.msra.mxu0 0
    %133 = vmatprep.subr.bf16.mxu0 0
    %134 = vmatpush1.bf16.msra.mxu0 0
    %135 = vmatprep.subr.bf16.mxu0 0
    %136 = vmatpush1.bf16.msra.mxu0 0
    %137 = vmatprep.subr.bf16.mxu0 0
    %138 = vmatpush1.bf16.msra.mxu0 0
    %139 = vmatprep.subr.bf16.mxu0 0
    %140 = vmatpush1.bf16.msra.mxu0 0
    %141 = vmatprep.subr.bf16.mxu0 0
    %142 = vmatpush1.bf16.msra.mxu0 0
    %143 = vmatprep.subr.bf16.mxu0 0
    %144 = vmatpush1.bf16.msra.mxu0 0
    %145 = vmatprep.subr.bf16.mxu0 0
    %146 = vmatpush1.bf16.msra.mxu0 0
    %147 = vmatprep.subr.bf16.mxu0 0
    %148 = vmatpush1.bf16.msra.mxu0 0
    %149 = vmatprep.subr.bf16.mxu0 0
    %150 = vmatpush1.bf16.msra.mxu0 0
    %151 = vmatprep.subr.bf16.mxu0 0
    %152 = vmatpush1.bf16.msra.mxu0 0
    %153 = vmatprep.subr.bf16.mxu0 0
    %154 = vmatpush1.bf16.msra.mxu0 0
    %155 = vmatprep.mubr.bf16.mxu0 0
    %156 = vmatmul.mubr.bf16.gmra.mrb[0].mxu0 %v121
    %v157 = vpop.f32.mrb[0].mxu0
    %v158 = vadd.f32 0.0, %v157
    %v159 = vpop.f32.mrb[0].mxu0
    %v160 = vpop.f32.mrb[0].mxu0
    %v161 = vpop.f32.mrb[0].mxu0
    %162 = vdwg.mxu0
    %v165 = vunpack.c.l.s4 1966171168
    %v166 = vunpack.c.0.s8 %v165
    %v167 = vlaneseq
    %v168 = vshrl.u32 %v167, 7
    %v169 = vsub.s32 %v166, %v168
    %v170 = vrot.slane %v158, %v169
    %v171 = vcombine.high %v170, %v170
    %v173 = vunpack.c.l.s4 1966171168
    %v174 = vunpack.c.0.s8 %v173
    %v175 = vlaneseq
    %v176 = vshrl.u32 %v175, 7
    %v177 = vsub.s32 %v174, %v176
    %v178 = vrot.slane %v170, %v177
    %v180 = vunpack.c.l.s4 1966171168
    %v181 = vunpack.c.0.s8 %v180
    %v182 = vlaneseq
    %v183 = vshrl.u32 %v182, 7
    %v184 = vsub.s32 %v181, %v183
    %v185 = vrot.slane %v171, %v184
    %v186 = vcombine.high %v178, %v178
    %v187 = vcombine.high %v185, %v185
    %v188 = vld [vmem:[#allocation5] sm:$0xf]
    %v189 = vlaneseq
    %v190 = vshrl.u32 %v189, 7
    %v191 = vsub.s32 0, %v190
    %v192 = vrot.slane %v178, %v191
    %v193 = vlaneseq
    %v194 = vshrl.u32 %v193, 7
    %v195 = vsub.s32 0, %v194
    %v196 = vrot.slane %v185, %v195
    %v197 = vlaneseq
    %v198 = vshrl.u32 %v197, 7
    %v199 = vsub.s32 0, %v198
    %v200 = vrot.slane %v186, %v199
    %v201 = vlaneseq
    %v202 = vshrl.u32 %v201, 7
    %v203 = vsub.s32 0, %v202
    %v204 = vrot.slane %v187, %v203
    %v209 = vadd.f32 %v192, %v188
    %v210 = vadd.f32 %v196, %v188
    %v211 = vadd.f32 %v200, %v188
    %v212 = vadd.f32 %v204, %v188
    %v213 = vtanh.pop %v209
    %v214 = vtanh.pop %v210
    %v215 = vtanh.pop %v211
    %v216 = vtanh.pop %v212
    %v221 = vcombine.low %v213, %v214
    %v222 = vcombine.low %v215, %v216
    %v225 = vpack.c.bf16 %v222, %v221
    %v226 = vld [vmem:[#allocation8] sm:$0xf]
    %v227 = vld [vmem:[#allocation8 + $0x4] sm:$0xf]
    %v228 = vld [vmem:[#allocation8 + $0x8] sm:$0xf]
    %v229 = vld [vmem:[#allocation8 + $0xc] sm:$0xf]
    %v230 = vld [vmem:[#allocation8 + $0x10] sm:$0xf]
    %v231 = vld [vmem:[#allocation8 + $0x14] sm:$0xf]
    %v232 = vld [vmem:[#allocation8 + $0x18] sm:$0xf]
    %v233 = vld [vmem:[#allocation8 + $0x1c] sm:$0xf]
    %v234 = vld [vmem:[#allocation8 + $0x20] sm:$0xf]
    %v235 = vld [vmem:[#allocation8 + $0x24] sm:$0xf]
    %v236 = vld [vmem:[#allocation8 + $0x28] sm:$0xf]
    %v237 = vld [vmem:[#allocation8 + $0x2c] sm:$0xf]
    %v238 = vld [vmem:[#allocation8 + $0x30] sm:$0xf]
    %v239 = vld [vmem:[#allocation8 + $0x34] sm:$0xf]
    %v240 = vld [vmem:[#allocation8 + $0x38] sm:$0xf]
    %v241 = vld [vmem:[#allocation8 + $0x3c] sm:$0xf]
    %v242 = vld [vmem:[%s4] sm:$0x1]
    %v244 = vlaneseq
    %v245 = vshrl.u32 %v244, 7
    %v246 = vsub.s32 0, %v245
    %v247 = vrot.slane %v242, %v246
    %v265 = vunpack.c.l.b16 %v226
    %v266 = vunpack.c.l.b16 %v227
    %v267 = vunpack.c.l.b16 %v228
    %v268 = vunpack.c.l.b16 %v229
    %v269 = vunpack.c.l.b16 %v230
    %v270 = vunpack.c.l.b16 %v231
    %v271 = vunpack.c.l.b16 %v232
    %v272 = vunpack.c.l.b16 %v233
    %v273 = vunpack.c.l.b16 %v234
    %v274 = vunpack.c.l.b16 %v235
    %v275 = vunpack.c.l.b16 %v236
    %v276 = vunpack.c.l.b16 %v237
    %v277 = vunpack.c.l.b16 %v238
    %v278 = vunpack.c.l.b16 %v239
    %v279 = vunpack.c.l.b16 %v240
    %v280 = vunpack.c.l.b16 %v241
    %v281 = vpack.c.b16 %v266, %v265
    %v282 = vpack.c.b16 %v268, %v267
    %v283 = vpack.c.b16 %v270, %v269
    %v284 = vpack.c.b16 %v272, %v271
    %v285 = vpack.c.b16 %v274, %v273
    %v286 = vpack.c.b16 %v276, %v275
    %v287 = vpack.c.b16 %v278, %v277
    %v288 = vpack.c.b16 %v280, %v279
    %297 = vmatprep.subr.bf16.mxu0 0
    %298 = vmatpush1.bf16.msra.mxu0 %v281
    %299 = vmatprep.subr.bf16.mxu0 0
    %300 = vmatpush1.bf16.msra.mxu0 %v282
    %301 = vmatprep.subr.bf16.mxu0 0
    %302 = vmatpush1.bf16.msra.mxu0 %v283
    %303 = vmatprep.subr.bf16.mxu0 0
    %304 = vmatpush1.bf16.msra.mxu0 %v284
    %305 = vmatprep.subr.bf16.mxu0 0
    %306 = vmatpush1.bf16.msra.mxu0 %v285
    %307 = vmatprep.subr.bf16.mxu0 0
    %308 = vmatpush1.bf16.msra.mxu0 %v286
    %309 = vmatprep.subr.bf16.mxu0 0
    %310 = vmatpush1.bf16.msra.mxu0 %v287
    %311 = vmatprep.subr.bf16.mxu0 0
    %312 = vmatpush1.bf16.msra.mxu0 %v288
    %313 = vmatprep.subr.bf16.mxu0 0
    %314 = vmatpush1.bf16.msra.mxu0 0
    %315 = vmatprep.subr.bf16.mxu0 0
    %316 = vmatpush1.bf16.msra.mxu0 0
    %317 = vmatprep.subr.bf16.mxu0 0
    %318 = vmatpush1.bf16.msra.mxu0 0
    %319 = vmatprep.subr.bf16.mxu0 0
    %320 = vmatpush1.bf16.msra.mxu0 0
    %321 = vmatprep.subr.bf16.mxu0 0
    %322 = vmatpush1.bf16.msra.mxu0 0
    %323 = vmatprep.subr.bf16.mxu0 0
    %324 = vmatpush1.bf16.msra.mxu0 0
    %325 = vmatprep.subr.bf16.mxu0 0
    %326 = vmatpush1.bf16.msra.mxu0 0
    %327 = vmatprep.subr.bf16.mxu0 0
    %328 = vmatpush1.bf16.msra.mxu0 0
    %329 = vmatprep.mubr.bf16.mxu0 0
    %330 = vmatmul.mubr.bf16.gmra.mrb[0].mxu0 %v225
    %v331 = vpop.f32.mrb[0].mxu0
    %v332 = vadd.f32 %v247, %v331
    %v333 = vpop.f32.mrb[0].mxu0
    %v334 = vpop.f32.mrb[0].mxu0
    %v335 = vadd.f32 %v247, %v334
    %v336 = vpop.f32.mrb[0].mxu0
    %337 = vdwg.mxu0
    %v338 = vtanh.pop %v332
    %v339 = vtanh.pop %v335
    %v340 = vpack.c.bf16 %v339, %v338
    %v341 = vld [vmem:[#allocation10] sm:$0xf]
    %v342 = vld [vmem:[#allocation10 + $0x4] sm:$0xf]
    %v343 = vld [vmem:[#allocation10 + $0x8] sm:$0xf]
    %v344 = vld [vmem:[#allocation10 + $0xc] sm:$0xf]
    %v345 = vld [vmem:[#allocation10 + $0x10] sm:$0xf]
    %v346 = vld [vmem:[#allocation10 + $0x14] sm:$0xf]
    %v347 = vld [vmem:[#allocation10 + $0x18] sm:$0xf]
    %v348 = vld [vmem:[#allocation10 + $0x1c] sm:$0xf]
    %v349 = vld [vmem:[#allocation10 + $0x20] sm:$0xf]
    %v350 = vld [vmem:[#allocation10 + $0x24] sm:$0xf]
    %v351 = vld [vmem:[#allocation10 + $0x28] sm:$0xf]
    %v352 = vld [vmem:[#allocation10 + $0x2c] sm:$0xf]
    %v353 = vld [vmem:[#allocation10 + $0x30] sm:$0xf]
    %v354 = vld [vmem:[#allocation10 + $0x34] sm:$0xf]
    %v355 = vld [vmem:[#allocation10 + $0x38] sm:$0xf]
    %v356 = vld [vmem:[#allocation10 + $0x3c] sm:$0xf]
    %v357 = vld [vmem:[%s6] sm:$0x1]
    %v359 = vlaneseq
    %v360 = vshrl.u32 %v359, 7
    %v361 = vsub.s32 0, %v360
    %v362 = vrot.slane %v357, %v361
    %v380 = vunpack.c.l.b16 %v341
    %v381 = vunpack.c.l.b16 %v342
    %v382 = vunpack.c.l.b16 %v343
    %v383 = vunpack.c.l.b16 %v344
    %v384 = vunpack.c.l.b16 %v345
    %v385 = vunpack.c.l.b16 %v346
    %v386 = vunpack.c.l.b16 %v347
    %v387 = vunpack.c.l.b16 %v348
    %v388 = vunpack.c.l.b16 %v349
    %v389 = vunpack.c.l.b16 %v350
    %v390 = vunpack.c.l.b16 %v351
    %v391 = vunpack.c.l.b16 %v352
    %v392 = vunpack.c.l.b16 %v353
    %v393 = vunpack.c.l.b16 %v354
    %v394 = vunpack.c.l.b16 %v355
    %v395 = vunpack.c.l.b16 %v356
    %v396 = vpack.c.b16 %v381, %v380
    %v397 = vpack.c.b16 %v383, %v382
    %v398 = vpack.c.b16 %v385, %v384
    %v399 = vpack.c.b16 %v387, %v386
    %v400 = vpack.c.b16 %v389, %v388
    %v401 = vpack.c.b16 %v391, %v390
    %v402 = vpack.c.b16 %v393, %v392
    %v403 = vpack.c.b16 %v395, %v394
    %412 = vmatprep.subr.bf16.mxu0 0
    %413 = vmatpush1.bf16.msra.mxu0 %v396
    %414 = vmatprep.subr.bf16.mxu0 0
    %415 = vmatpush1.bf16.msra.mxu0 %v397
    %416 = vmatprep.subr.bf16.mxu0 0
    %417 = vmatpush1.bf16.msra.mxu0 %v398
    %418 = vmatprep.subr.bf16.mxu0 0
    %419 = vmatpush1.bf16.msra.mxu0 %v399
    %420 = vmatprep.subr.bf16.mxu0 0
    %421 = vmatpush1.bf16.msra.mxu0 %v400
    %422 = vmatprep.subr.bf16.mxu0 0
    %423 = vmatpush1.bf16.msra.mxu0 %v401
    %424 = vmatprep.subr.bf16.mxu0 0
    %425 = vmatpush1.bf16.msra.mxu0 %v402
    %426 = vmatprep.subr.bf16.mxu0 0
    %427 = vmatpush1.bf16.msra.mxu0 %v403
    %428 = vmatprep.subr.bf16.mxu0 0
    %429 = vmatpush1.bf16.msra.mxu0 0
    %430 = vmatprep.subr.bf16.mxu0 0
    %431 = vmatpush1.bf16.msra.mxu0 0
    %432 = vmatprep.subr.bf16.mxu0 0
    %433 = vmatpush1.bf16.msra.mxu0 0
    %434 = vmatprep.subr.bf16.mxu0 0
    %435 = vmatpush1.bf16.msra.mxu0 0
    %436 = vmatprep.subr.bf16.mxu0 0
    %437 = vmatpush1.bf16.msra.mxu0 0
    %438 = vmatprep.subr.bf16.mxu0 0
    %439 = vmatpush1.bf16.msra.mxu0 0
    %440 = vmatprep.subr.bf16.mxu0 0
    %441 = vmatpush1.bf16.msra.mxu0 0
    %442 = vmatprep.subr.bf16.mxu0 0
    %443 = vmatpush1.bf16.msra.mxu0 0
    %444 = vmatprep.mubr.bf16.mxu0 0
    %445 = vmatmul.mubr.bf16.gmra.mrb[0].mxu0 %v340
    %v446 = vpop.f32.mrb[0].mxu0
    %v447 = vadd.f32 %v362, %v446
    %v448 = vpop.f32.mrb[0].mxu0
    %v449 = vpop.f32.mrb[0].mxu0
    %v450 = vadd.f32 %v362, %v449
    %v451 = vpop.f32.mrb[0].mxu0
    %452 = vdwg.mxu0
    %453 = vmax.xlane.f32.xlu0 %v447
    %v454 = vpop.xlane.xlu0 %453
    %455 = vmax.xlane.f32.xlu0 %v450
    %v456 = vpop.xlane.xlu0 %455
    %v457 = vsub.f32 %v447, %v454
    %v458 = vsub.f32 %v450, %v456
    %v459 = vmul.f32 %v457, 1.442695
    %v460 = vpow.pop %v459
    %v461 = vmul.f32 %v458, 1.442695
    %v462 = vpow.pop %v461
    %v463 = vld [vmem:[#allocation11] sm:$0xff]
    %v464 = vld [vmem:[#allocation11 + $0x8] sm:$0xff]
    %v465 = vld [vmem:[#allocation11 + $0x10] sm:$0xff]
    %v466 = vld [vmem:[#allocation11 + $0x18] sm:$0xff]
    %v467 = vld [vmem:[#allocation11 + $0x20] sm:$0xff]
    %v468 = vld [vmem:[#allocation11 + $0x28] sm:$0xff]
    %v469 = vld [vmem:[#allocation11 + $0x30] sm:$0xff]
    %v470 = vld [vmem:[#allocation11 + $0x38] sm:$0xff]
    %v471 = vld [vmem:[#allocation11 + $0x40] sm:$0xff]
    %v472 = vld [vmem:[#allocation11 + $0x48] sm:$0xff]
    %v473 = vld [vmem:[#allocation11 + $0x50] sm:$0xff]
    %v474 = vld [vmem:[#allocation11 + $0x58] sm:$0xff]
    %v475 = vld [vmem:[#allocation11 + $0x60] sm:$0xff]
    %v476 = vld [vmem:[#allocation11 + $0x68] sm:$0xff]
    %v477 = vld [vmem:[#allocation11 + $0x70] sm:$0xff]
    %v478 = vld [vmem:[#allocation11 + $0x78] sm:$0xff]
    %479 = vmatprep.subr.mxu0 0.0
    %480 = vmatpush1.msra.mxu0 %v463
    %481 = vmatprep.subr.mxu0 0.0
    %482 = vmatpush1.msra.mxu0 %v464
    %483 = vmatprep.subr.mxu0 0.0
    %484 = vmatpush1.msra.mxu0 %v465
    %485 = vmatprep.subr.mxu0 0.0
    %486 = vmatpush1.msra.mxu0 %v466
    %487 = vmatprep.subr.mxu0 0.0
    %488 = vmatpush1.msra.mxu0 %v467
    %489 = vmatprep.subr.mxu0 0.0
    %490 = vmatpush1.msra.mxu0 %v468
    %491 = vmatprep.subr.mxu0 0.0
    %492 = vmatpush1.msra.mxu0 %v469
    %493 = vmatprep.subr.mxu0 0.0
    %494 = vmatpush1.msra.mxu0 %v470
    %495 = vmatprep.subr.mxu0 0.0
    %496 = vmatpush1.msra.mxu0 %v471
    %497 = vmatprep.subr.mxu0 0.0
    %498 = vmatpush1.msra.mxu0 %v472
    %499 = vmatprep.subr.mxu0 0.0
    %500 = vmatpush1.msra.mxu0 %v473
    %501 = vmatprep.subr.mxu0 0.0
    %502 = vmatpush1.msra.mxu0 %v474
    %503 = vmatprep.subr.mxu0 0.0
    %504 = vmatpush1.msra.mxu0 %v475
    %505 = vmatprep.subr.mxu0 0.0
    %506 = vmatpush1.msra.mxu0 %v476
    %507 = vmatprep.subr.mxu0 0.0
    %508 = vmatpush1.msra.mxu0 %v477
    %509 = vmatprep.subr.mxu0 0.0
    %510 = vmatpush1.msra.mxu0 %v478
    %511 = vmatprep.subr.mxu0 0.0
    %512 = vmatpush1.msra.mxu0 0.0
    %513 = vmatprep.subr.mxu0 0.0
    %514 = vmatpush1.msra.mxu0 0.0
    %515 = vmatprep.subr.mxu0 0.0
    %516 = vmatpush1.msra.mxu0 0.0
    %517 = vmatprep.subr.mxu0 0.0
    %518 = vmatpush1.msra.mxu0 0.0
    %519 = vmatprep.subr.mxu0 0.0
    %520 = vmatpush1.msra.mxu0 0.0
    %521 = vmatprep.subr.mxu0 0.0
    %522 = vmatpush1.msra.mxu0 0.0
    %523 = vmatprep.subr.mxu0 0.0
    %524 = vmatpush1.msra.mxu0 0.0
    %525 = vmatprep.subr.mxu0 0.0
    %526 = vmatpush1.msra.mxu0 0.0
    %527 = vmatprep.subr.mxu0 0.0
    %528 = vmatpush1.msra.mxu0 0.0
    %529 = vmatprep.subr.mxu0 0.0
    %530 = vmatpush1.msra.mxu0 0.0
    %531 = vmatprep.subr.mxu0 0.0
    %532 = vmatpush1.msra.mxu0 0.0
    %533 = vmatprep.subr.mxu0 0.0
    %534 = vmatpush1.msra.mxu0 0.0
    %535 = vmatprep.subr.mxu0 0.0
    %536 = vmatpush1.msra.mxu0 0.0
    %537 = vmatprep.subr.mxu0 0.0
    %538 = vmatpush1.msra.mxu0 0.0
    %539 = vmatprep.subr.mxu0 0.0
    %540 = vmatpush1.msra.mxu0 0.0
    %541 = vmatprep.subr.mxu0 0.0
    %542 = vmatpush1.msra.mxu0 0.0
    %543 = vmatprep.mubr.f32.mxu0 0.0
    %544 = vmatmul.mubr.f32.gmra.mrb[0].mxu0 %v460
    %v545 = vpop.f32.mrb[0].mxu0
    %v546 = vadd.f32 0.0, %v545
    %v547 = vpop.f32.mrb[0].mxu0
    %548 = vmatprep.mubr.f32.mxu0 0.0
    %549 = vmatmul.mubr.f32.gmra.mrb[0].mxu0 %v462
    %v550 = vpop.f32.mrb[0].mxu0
    %v551 = vadd.f32 0.0, %v550
    %v552 = vpop.f32.mrb[0].mxu0
    %553 = vdwg.mxu0
    %v554 = vrcp.pop %v546
    %v555 = vrcp.pop %v551
    %v556 = vmul.f32 %v460, %v554
    %v557 = vmul.f32 %v462, %v555
    %558 = vst [vmem:[#allocation13] sm:$0xff] %v556
    %559 = vst [vmem:[#allocation13 + $0x8] sm:$0xff] %v557
    // Predicated region
    $region58: #{tpu_custom_call.1} parent=1 // pred_check
      _
    $region59: #{tpu_custom_call.1} parent=1 // pred_check_branch
      %561 = sbr.rel (0) target = $region61
    $region60: #{tpu_custom_call.1} parent=1 // pred_region
      %s563 = ssub.s32 256, 256
      %564 = vsyncadd [#allocation4], %s563
      %s565 = sshll.u32 [#allocation13], 4
      %s566 = int_to_ptr.vmem [resolvable:$true] %s565
      %571 = dma.vmem_to_hbm [thread:$0]  %s566, 256, %s8, [#allocation4], 128, 128, 8
    $region61: #{tpu_custom_call.1} parent=1 // pred_fallthru
      _
    // Predicated region
    $region62: #{tpu_custom_call.1} parent=1 // pred_check
      _
    $region63: #{tpu_custom_call.1} parent=1 // pred_check_branch
      %573 = sbr.rel (0) target = $region65
    $region64: #{tpu_custom_call.1} parent=1 // pred_region
      %574 = dma.done [#allocation4], 256
    $region65: #{tpu_custom_call.1} parent=1 // pred_fallthru
      _
    %575 = vsyncpa [#allocation3], 1
    %576 = vsyncpa [#allocation6], 1
    %577 = vsyncpa [#allocation9], 1
    %578 = vsyncpa [#allocation12], 1
    %579 = vsyncpa [#allocation4], 1

</llo_original>
